<compile_context>
chip_gen: v7x
topology: tpu7x:2x2x1
jax: 0.10.0
libtpu: 0.0.40
codegen_flags: <defaults>
</compile_context>

<pallas_src>
import functools

import numpy as np
import jax
import jax.numpy as jnp
from jax.experimental import pallas as pl
from jax.experimental.pallas import tpu as pltpu


def _round_up(x, m):
    return ((x + m - 1) // m) * m


def _itemsize(dtype):
    return np.dtype(dtype).itemsize


def _pick_tile(d, cap=512):
    """Largest {512,256,128} tile that divides a 128-multiple dim."""
    for t in (cap, 256, 128):
        if d >= t and d % t == 0:
            return t
    return d


def _vmem_ceiling_bytes():
    """Generation-aware scoped-VMEM ceiling (v7x = 64 MiB phys, v5e/v6e = 128 MiB)."""
    try:
        cap = int(pltpu.get_tpu_info().vmem_capacity_bytes)
        return max(32 << 20, min(cap * 3 // 4, 96 << 20))
    except Exception:
        return 64 << 20  # safe on every generation


def _apply_act(y, nonlinearity, alpha):
    if nonlinearity == "relu":
        return jnp.maximum(y, 0.0)
    if nonlinearity == "lrelu":
        return jnp.where(y > 0.0, y, alpha * y)
    return y  # identity


# -----------------------------------------------------------------------------
# Kernels
# -----------------------------------------------------------------------------
def _mlp_fused_kernel(*refs, n_layers, activate_last, nonlinearity, alpha,
                      compute_dtype):
    """h = x; for each layer: h = act(h @ W_i + b_i); o = h.  All in VMEM/vregs."""
    x_ref = refs[0]
    w_refs = refs[1:1 + n_layers]
    b_refs = refs[1 + n_layers:1 + 2 * n_layers]
    o_ref = refs[1 + 2 * n_layers]

    h = x_ref[...]
    for i in range(n_layers):
        lhs = h.astype(compute_dtype)                 # MXU operands in compute_dtype
        rhs = w_refs[i][...].astype(compute_dtype)
        b = b_refs[i][...]                            # (1, Dout_pad) f32
        y = jnp.dot(lhs, rhs, preferred_element_type=jnp.float32) + b
        if (i < n_layers - 1) or activate_last:
            y = _apply_act(y, nonlinearity, alpha)
        h = y                                          # stays f32 between layers

    o_ref[...] = h.astype(o_ref.dtype)


def _linear_act_kernel(x_ref, w_ref, b_ref, o_ref, acc_ref, *, apply_act,
                       nonlinearity, alpha, compute_dtype):
    """One Linear(+activation), K-streamed with an f32 VMEM accumulator."""
    @pl.when(pl.program_id(2) == 0)
    def _():
        acc_ref[...] = jnp.zeros_like(acc_ref)

    lhs = x_ref[...].astype(compute_dtype)
    rhs = w_ref[...].astype(compute_dtype)
    acc_ref[...] += jnp.dot(lhs, rhs, preferred_element_type=jnp.float32)

    @pl.when(pl.program_id(2) == pl.num_programs(2) - 1)
    def _():
        y = acc_ref[...] + b_ref[...]
        if apply_act:
            y = _apply_act(y, nonlinearity, alpha)
        o_ref[...] = y.astype(o_ref.dtype)


# -----------------------------------------------------------------------------
# Module
# -----------------------------------------------------------------------------
class MLP:
    """JAX/Pallas port of noge.neural.mlp.MLP (forward pass, eval mode)."""

    def __init__(self, dims, nonlinearity="relu", alpha=0.2, activate_last=False,
                 dropout=0, compute_dtype=jnp.bfloat16, force_layerwise=False,
                 key=None):
        assert len(dims) >= 2
        self.nonlinearity = nonlinearity or "identity"
        assert self.nonlinearity in ("relu", "lrelu", "identity")
        self.alpha = float(alpha)
        self.activate_last = bool(activate_last)
        self.compute_dtype = compute_dtype
        # TODO(synk): training-mode dropout (p>0) not implemented; forward matches
        # eval mode, where nn.Dropout is the identity.
        self.dropout = dropout

        if key is None:
            key = jax.random.PRNGKey(0)

        self.dims = list(dims)
        self.dims_pad = [_round_up(d, 128) for d in self.dims]  # lane-dense features

        self.weights = []       # unpadded (in, out) f32 -- pure-JAX reference
        self.biases = []        # unpadded (out,) f32
        self.weights_pad = []   # zero-padded (in_pad, out_pad), compute_dtype
        self.biases_pad = []    # zero-padded (1, out_pad), f32
        for d1, d2, p1, p2 in zip(self.dims[:-1], self.dims[1:],
                                  self.dims_pad[:-1], self.dims_pad[1:]):
            key, kw, kb = jax.random.split(key, 3)
            bound = 1.0 / float(d1) ** 0.5           # PyTorch Linear default init
            w = jax.random.uniform(kw, (d2, d1), jnp.float32, -bound, bound)
            b = jax.random.uniform(kb, (d2,), jnp.float32, -bound, bound)
            w_t = w.T                                  # (in, out)
            self.weights.append(w_t)
            self.biases.append(b)
            wp = jnp.zeros((p1, p2), jnp.float32).at[:d1, :d2].set(w_t)
            bp = jnp.zeros((1, p2), jnp.float32).at[0, :d2].set(b)
            self.weights_pad.append(wp.astype(compute_dtype))
            self.biases_pad.append(bp)

        self._param_bytes = (
            sum(int(w.size) * _itemsize(w.dtype) for w in self.weights_pad)
            + sum(int(b.size) * _itemsize(b.dtype) for b in self.biases_pad))
        # Resident (worst-case double-buffered) weight set must leave room on
        # v7x's 64 MiB VMEM; otherwise stream each layer over a K grid axis.
        self._layerwise = bool(force_layerwise) or (2 * self._param_bytes > (40 << 20))

    # ------------------------------------------------------------------ public
    def __call__(self, x):
        B, Din = x.shape
        assert Din == self.dims[0]
        if self._layerwise:
            return self._layerwise_forward(x)
        return self._fused_forward(x)

    def reference(self, x):
        """Pure-JAX reference (unpadded f32) for correctness checking."""
        n = len(self.weights)
        for i, (w, b) in enumerate(zip(self.weights, self.biases)):
            x = x @ w + b
            if self.activate_last or i != n - 1:
                x = _apply_act(x, self.nonlinearity, self.alpha)
        return x

    # ------------------------------------------------------------- fused path
    def _fused_forward(self, x):
        B, Din = x.shape
        d0_pad = self.dims_pad[0]
        dlast, dlast_pad = self.dims[-1], self.dims_pad[-1]
        out_dtype = x.dtype
        bf16 = np.dtype(self.compute_dtype) == np.dtype(jnp.bfloat16)
        in_dtype = jnp.bfloat16 if bf16 else x.dtype   # halve x-tile HBM traffic

        # Batch tile: largest that fits an activation VMEM budget; guarantee >=2
        # "parallel" grid steps whenever possible (both v7x TensorCores busy).
        B8 = _round_up(B, 8)
        max_feat = max(self.dims_pad)
        bytes_per_row = (2 * d0_pad * _itemsize(in_dtype)      # x tile (dbl buf)
                         + 2 * dlast_pad * _itemsize(out_dtype)  # out tile (dbl buf)
                         + 2 * max_feat * 4)                    # live f32 intermediates
        act_budget = 16 << 20
        tm_cap = max(8, (act_budget // bytes_per_row) // 8 * 8)
        tm = min(B8, tm_cap, 2048)
        if B8 > tm and tm >= 256:
            tm = (tm // 256) * 256                     # MXU/lane friendly once tiling
        B_pad = _round_up(B, tm)
        if B_pad // tm < 2 and B8 >= 16:               # >= 2 parallel steps
            tm = _round_up((B8 + 1) // 2, 8)
            B_pad = _round_up(B, tm)

        # Pad/cast the activation slab only when actually needed.
        if (B_pad != B) or (d0_pad != Din):
            x_pad = jnp.zeros((B_pad, d0_pad), in_dtype).at[:B, :Din].set(
                x.astype(in_dtype))
        elif x.dtype != np.dtype(in_dtype):
            x_pad = x.astype(in_dtype)
        else:
            x_pad = x

        try:
            out_pad = self._fused_call(x_pad, tm, out_dtype, single_buffer=True)
        except Exception:
            # TODO(synk): pipeline_mode=pl.Buffered(1) unsupported on this jax
            # version -- fall back to default (double-buffered) weight specs.
            out_pad = self._fused_call(x_pad, tm, out_dtype, single_buffer=False)

        if (B_pad != B) or (dlast_pad != dlast):
            return out_pad[:B, :dlast]
        return out_pad

    def _fused_call(self, x_pad, tm, out_dtype, single_buffer):
        n_layers = len(self.weights_pad)
        B_pad, d0_pad = x_pad.shape
        dlast_pad = self.dims_pad[-1]

        kernel = functools.partial(
            _mlp_fused_kernel, n_layers=n_layers,
            activate_last=self.activate_last, nonlinearity=self.nonlinearity,
            alpha=self.alpha, compute_dtype=self.compute_dtype)

        def const_spec(shape):
            # Grid-invariant operand (index_map is constant): one VMEM buffer is
            # enough -- halves resident weight/bias VMEM.
            if single_buffer:
                return pl.BlockSpec(shape, lambda i: (0, 0),
                                    pipeline_mode=pl.Buffered(1))
            return pl.BlockSpec(shape, lambda i: (0, 0))

        in_specs = [pl.BlockSpec((tm, d0_pad), lambda i: (i, 0))]
        in_specs += [const_spec(w.shape) for w in self.weights_pad]
        in_specs += [const_spec(b.shape) for b in self.biases_pad]

        # Deterministic VMEM budget: params (assume 2 buffers worst case) +
        # double-buffered activation tiles + live f32 intermediates, 1.5x headroom.
        max_feat = max(self.dims_pad)
        act_bytes = (2 * tm * d0_pad * _itemsize(x_pad.dtype)
                     + 2 * tm * dlast_pad * _itemsize(out_dtype)
                     + 2 * tm * max_feat * 4)
        needed = 2 * self._param_bytes + act_bytes
        vmem_limit = min(max(needed * 3 // 2, 32 << 20), _vmem_ceiling_bytes())

        flops = 2 * B_pad * sum(p1 * p2 for p1, p2 in
                                zip(self.dims_pad[:-1], self.dims_pad[1:]))
        bytes_accessed = (int(x_pad.size) * _itemsize(x_pad.dtype)
                          + B_pad * dlast_pad * _itemsize(out_dtype)
                          + self._param_bytes)

        return pl.pallas_call(
            kernel,
            out_shape=jax.ShapeDtypeStruct((B_pad, dlast_pad), out_dtype),
            grid=(B_pad // tm,),
            in_specs=in_specs,
            out_specs=pl.BlockSpec((tm, dlast_pad), lambda i: (i, 0)),
            compiler_params=pltpu.CompilerParams(
                dimension_semantics=("parallel",),
                vmem_limit_bytes=int(vmem_limit)),
            cost_estimate=pl.CostEstimate(
                flops=int(flops), transcendentals=0,
                bytes_accessed=int(bytes_accessed)),
        )(x_pad, *self.weights_pad, *self.biases_pad)

    # --------------------------------------------------- K/N-streamed fallback
    def _layerwise_forward(self, x):
        """Per-layer tiled matmul (K grid axis + f32 VMEM accumulator).  Used when
        the whole resident weight set would not fit v7x's 64 MiB VMEM."""
        B, Din = x.shape
        out_dtype = x.dtype
        d0_pad = self.dims_pad[0]

        B8 = _round_up(B, 8)
        tm = min(B8, 256)
        B_pad = _round_up(B, tm)
        if B_pad // tm < 2 and B8 >= 16:               # >= 2 parallel steps
            tm = _round_up((B8 + 1) // 2, 8)
            B_pad = _round_up(B, tm)

        if (B_pad != B) or (d0_pad != Din) or (x.dtype != np.dtype(jnp.float32)):
            h = jnp.zeros((B_pad, d0_pad), jnp.float32).at[:B, :Din].set(
                x.astype(jnp.float32))
        else:
            h = x

        n = len(self.weights_pad)
        for i, (wp, bp) in enumerate(zip(self.weights_pad, self.biases_pad)):
            apply_act = (i < n - 1) or self.activate_last
            h = self._linear_layer(h, wp, bp, apply_act, tm)

        dlast, dlast_pad = self.dims[-1], self.dims_pad[-1]
        out = h
        if (B_pad != B) or (dlast_pad != dlast):
            out = out[:B, :dlast]
        return out.astype(out_dtype)

    def _linear_layer(self, h, wp, bp, apply_act, tm):
        B_pad, K_pad = h.shape
        _, N_pad = wp.shape
        tk = _pick_tile(K_pad)
        tn = _pick_tile(N_pad)

        kernel = functools.partial(
            _linear_act_kernel, apply_act=apply_act,
            nonlinearity=self.nonlinearity, alpha=self.alpha,
            compute_dtype=self.compute_dtype)

        tile_bytes = (2 * (tm * tk * _itemsize(h.dtype)
                           + tk * tn * _itemsize(wp.dtype)
                           + tn * 4
                           + tm * tn * 4)
                      + tm * tn * 4)                       # accumulator scratch
        vmem_limit = min(max(tile_bytes * 3 // 2, 32 << 20), _vmem_ceiling_bytes())

        flops = 2 * B_pad * K_pad * N_pad
        bytes_accessed = (int(h.size) * _itemsize(h.dtype)
                          + int(wp.size) * _itemsize(wp.dtype) * (B_pad // tm)
                          + B_pad * N_pad * 4)

        return pl.pallas_call(
            kernel,
            out_shape=jax.ShapeDtypeStruct((B_pad, N_pad), jnp.float32),
            grid=(B_pad // tm, N_pad // tn, K_pad // tk),
            in_specs=[pl.BlockSpec((tm, tk), lambda i, j, k: (i, k)),
                      pl.BlockSpec((tk, tn), lambda i, j, k: (k, j)),
                      pl.BlockSpec((1, tn), lambda i, j, k: (0, j))],
            out_specs=pl.BlockSpec((tm, tn), lambda i, j, k: (i, j)),
            scratch_shapes=[pltpu.VMEM((tm, tn), jnp.float32)],
            compiler_params=pltpu.CompilerParams(
                dimension_semantics=("parallel", "parallel", "arbitrary"),
                vmem_limit_bytes=int(vmem_limit)),
            cost_estimate=pl.CostEstimate(
                flops=int(flops), transcendentals=0,
                bytes_accessed=int(bytes_accessed)),
        )(h, wp, bp)


# -----------------------------------------------------------------------------
if __name__ == "__main__":
    key = jax.random.PRNGKey(0)
    kx1, kx2, kp1, kp2, kp3 = jax.random.split(key, 5)

    dims = [32, 64, 48, 16]   # 3 Linear layers; last un-activated by default

    # 1) f32 MXU operands, relu, small batch -- strict correctness
    mlp_f32 = MLP(dims, nonlinearity="relu", compute_dtype=jnp.float32, key=kp1)
    x = jax.random.normal(kx1, (8, dims[0]), jnp.float32)
    out = jax.block_until_ready(mlp_f32(x))
    ref = mlp_f32.reference(x)
    assert out.shape == (8, dims[-1]) and out.dtype == x.dtype
    assert jnp.allclose(out, ref, atol=1e-5, rtol=1e-5), "f32 small-batch mismatch"

    # 2) non-aligned larger batch -> >=2-step parallel grid + row padding
    x2 = jax.random.normal(kx2, (300, dims[0]), jnp.float32)
    out2 = jax.block_until_ready(mlp_f32(x2))
    ref2 = mlp_f32.reference(x2)
    assert out2.shape == (300, dims[-1])
    assert jnp.allclose(out2, ref2, atol=1e-5, rtol=1e-5), "f32 tiled-batch mismatch"

    # 3) default bf16 MXU operands (f32 accumulate), leaky-relu, activate_last
    mlp_bf16 = MLP(dims, nonlinearity="lrelu", alpha=0.2, activate_last=True, key=kp2)
    out3 = jax.block_until_ready(mlp_bf16(x))
    ref3 = mlp_bf16.reference(x)
    assert out3.shape == (8, dims[-1])
    assert jnp.allclose(out3, ref3, atol=5e-2, rtol=5e-2), "bf16 fused path mismatch"

    # 4) K/N-streamed (layerwise) path, exercised at small shapes via force_layerwise
    mlp_stream = MLP(dims, nonlinearity="relu", compute_dtype=jnp.float32,
                     force_layerwise=True, key=kp3)
    out4 = jax.block_until_ready(mlp_stream(x2))
    ref4 = mlp_stream.reference(x2)
    assert out4.shape == (300, dims[-1])
    assert jnp.allclose(out4, ref4, atol=1e-5, rtol=1e-5), "layerwise path mismatch"

    print("KERNEL_OK")
</pallas_src>

<mosaic_0001>
module attributes {stable_mosaic.version = 11 : i64} {
  func.func @_mlp_fused_kernel(%arg0: i32, %arg1: memref<8x128xf32, #tpu.memory_space<vmem>>, %arg2: memref<128x128xf32, #tpu.memory_space<vmem>>, %arg3: memref<128x128xf32, #tpu.memory_space<vmem>>, %arg4: memref<128x128xf32, #tpu.memory_space<vmem>>, %arg5: memref<1x128xf32, #tpu.memory_space<vmem>>, %arg6: memref<1x128xf32, #tpu.memory_space<vmem>>, %arg7: memref<1x128xf32, #tpu.memory_space<vmem>>, %arg8: memref<8x128xf32, #tpu.memory_space<vmem>>) attributes {dimension_semantics = [#tpu.dimension_semantics<parallel>], iteration_bounds = array<i64: 1>, scalar_prefetch = 0 : i64, scratch_operands = 0 : i64, tpu.core_type = #tpu.core_type<tc>, window_params = [{transform_indices = @transform_0, window_bounds = array<i64: 8, 128>}, {pipeline_mode = #tpu.pipeline_mode<synchronous>, transform_indices = @transform_1, window_bounds = array<i64: 128, 128>}, {pipeline_mode = #tpu.pipeline_mode<synchronous>, transform_indices = @transform_2, window_bounds = array<i64: 128, 128>}, {pipeline_mode = #tpu.pipeline_mode<synchronous>, transform_indices = @transform_3, window_bounds = array<i64: 128, 128>}, {pipeline_mode = #tpu.pipeline_mode<synchronous>, transform_indices = @transform_4, window_bounds = array<i64: 1, 128>}, {pipeline_mode = #tpu.pipeline_mode<synchronous>, transform_indices = @transform_5, window_bounds = array<i64: 1, 128>}, {pipeline_mode = #tpu.pipeline_mode<synchronous>, transform_indices = @transform_6, window_bounds = array<i64: 1, 128>}, {transform_indices = @transform_7, window_bounds = array<i64: 8, 128>}]} {
    %c0 = arith.constant 0 : index
    %c0_0 = arith.constant 0 : index
    %0 = vector.load %arg1[%c0, %c0_0] : memref<8x128xf32, #tpu.memory_space<vmem>>, vector<8x128xf32>
    %c0_1 = arith.constant 0 : index
    %c0_2 = arith.constant 0 : index
    %1 = vector.load %arg2[%c0_1, %c0_2] : memref<128x128xf32, #tpu.memory_space<vmem>>, vector<128x128xf32>
    %c0_3 = arith.constant 0 : index
    %c0_4 = arith.constant 0 : index
    %2 = vector.load %arg5[%c0_3, %c0_4] : memref<1x128xf32, #tpu.memory_space<vmem>>, vector<1x128xf32>
    %cst = arith.constant dense<0.000000e+00> : vector<8x128xf32>
    %3 = tpu.matmul %0, %1, %cst {dimension_numbers = #tpu.dot_dimension_numbers<[1], [0], [0], [1], [0, 0, 1, 1], [], []>} : vector<8x128xf32>, vector<128x128xf32>, vector<8x128xf32> -> vector<8x128xf32>
    %4 = vector.broadcast %2 : vector<1x128xf32> to vector<8x128xf32>
    %5 = arith.addf %3, %4 : vector<8x128xf32>
    %cst_5 = arith.constant 0.000000e+00 : f32
    %6 = vector.broadcast %cst_5 : f32 to vector<8x128xf32>
    %7 = arith.maximumf %5, %6 : vector<8x128xf32>
    %c0_6 = arith.constant 0 : index
    %c0_7 = arith.constant 0 : index
    %8 = vector.load %arg3[%c0_6, %c0_7] : memref<128x128xf32, #tpu.memory_space<vmem>>, vector<128x128xf32>
    %c0_8 = arith.constant 0 : index
    %c0_9 = arith.constant 0 : index
    %9 = vector.load %arg6[%c0_8, %c0_9] : memref<1x128xf32, #tpu.memory_space<vmem>>, vector<1x128xf32>
    %cst_10 = arith.constant dense<0.000000e+00> : vector<8x128xf32>
    %10 = tpu.matmul %7, %8, %cst_10 {dimension_numbers = #tpu.dot_dimension_numbers<[1], [0], [0], [1], [0, 0, 1, 1], [], []>} : vector<8x128xf32>, vector<128x128xf32>, vector<8x128xf32> -> vector<8x128xf32>
    %11 = vector.broadcast %9 : vector<1x128xf32> to vector<8x128xf32>
    %12 = arith.addf %10, %11 : vector<8x128xf32>
    %cst_11 = arith.constant 0.000000e+00 : f32
    %13 = vector.broadcast %cst_11 : f32 to vector<8x128xf32>
    %14 = arith.maximumf %12, %13 : vector<8x128xf32>
    %c0_12 = arith.constant 0 : index
    %c0_13 = arith.constant 0 : index
    %15 = vector.load %arg4[%c0_12, %c0_13] : memref<128x128xf32, #tpu.memory_space<vmem>>, vector<128x128xf32>
    %c0_14 = arith.constant 0 : index
    %c0_15 = arith.constant 0 : index
    %16 = vector.load %arg7[%c0_14, %c0_15] : memref<1x128xf32, #tpu.memory_space<vmem>>, vector<1x128xf32>
    %cst_16 = arith.constant dense<0.000000e+00> : vector<8x128xf32>
    %17 = tpu.matmul %14, %15, %cst_16 {dimension_numbers = #tpu.dot_dimension_numbers<[1], [0], [0], [1], [0, 0, 1, 1], [], []>} : vector<8x128xf32>, vector<128x128xf32>, vector<8x128xf32> -> vector<8x128xf32>
    %18 = vector.broadcast %16 : vector<1x128xf32> to vector<8x128xf32>
    %19 = arith.addf %17, %18 : vector<8x128xf32>
    %c0_17 = arith.constant 0 : index
    %c0_18 = arith.constant 0 : index
    %20 = vector.load %arg8[%c0_17, %c0_18] : memref<8x128xf32, #tpu.memory_space<vmem>>, vector<8x128xf32>
    tpu.vector_store %arg8[%c0_17, %c0_18], %19 {strides = array<i32>} : memref<8x128xf32, #tpu.memory_space<vmem>>, vector<8x128xf32>,
    return
  }
  func.func @transform_0(%arg0: i32) -> (i32, i32) {
    %c0_i32 = arith.constant 0 : i32
    %c0_i32_0 = arith.constant 0 : i32
    return %arg0, %c0_i32 : i32, i32
  }
  func.func @transform_1(%arg0: i32) -> (i32, i32) {
    %c0_i32 = arith.constant 0 : i32
    %c0_i32_0 = arith.constant 0 : i32
    %c0_i32_1 = arith.constant 0 : i32
    return %c0_i32, %c0_i32_0 : i32, i32
  }
  func.func @transform_2(%arg0: i32) -> (i32, i32) {
    %c0_i32 = arith.constant 0 : i32
    %c0_i32_0 = arith.constant 0 : i32
    %c0_i32_1 = arith.constant 0 : i32
    return %c0_i32, %c0_i32_0 : i32, i32
  }
  func.func @transform_3(%arg0: i32) -> (i32, i32) {
    %c0_i32 = arith.constant 0 : i32
    %c0_i32_0 = arith.constant 0 : i32
    %c0_i32_1 = arith.constant 0 : i32
    return %c0_i32, %c0_i32_0 : i32, i32
  }
  func.func @transform_4(%arg0: i32) -> (i32, i32) {
    %c0_i32 = arith.constant 0 : i32
    %c0_i32_0 = arith.constant 0 : i32
    %c0_i32_1 = arith.constant 0 : i32
    return %c0_i32, %c0_i32_0 : i32, i32
  }
  func.func @transform_5(%arg0: i32) -> (i32, i32) {
    %c0_i32 = arith.constant 0 : i32
    %c0_i32_0 = arith.constant 0 : i32
    %c0_i32_1 = arith.constant 0 : i32
    return %c0_i32, %c0_i32_0 : i32, i32
  }
  func.func @transform_6(%arg0: i32) -> (i32, i32) {
    %c0_i32 = arith.constant 0 : i32
    %c0_i32_0 = arith.constant 0 : i32
    %c0_i32_1 = arith.constant 0 : i32
    return %c0_i32, %c0_i32_0 : i32, i32
  }
  func.func @transform_7(%arg0: i32) -> (i32, i32) {
    %c0_i32 = arith.constant 0 : i32
    %c0_i32_0 = arith.constant 0 : i32
    return %arg0, %c0_i32 : i32, i32
  }
}

module attributes {stable_mosaic.version = 11 : i64} {
  func.func @_mlp_fused_kernel(%arg0: i32, %arg1: memref<8x128xf32, #tpu.memory_space<vmem>>, %arg2: memref<128x128xf32, #tpu.memory_space<vmem>>, %arg3: memref<128x128xf32, #tpu.memory_space<vmem>>, %arg4: memref<128x128xf32, #tpu.memory_space<vmem>>, %arg5: memref<1x128xf32, #tpu.memory_space<vmem>>, %arg6: memref<1x128xf32, #tpu.memory_space<vmem>>, %arg7: memref<1x128xf32, #tpu.memory_space<vmem>>, %arg8: memref<8x128xf32, #tpu.memory_space<vmem>>) attributes {dimension_semantics = [#tpu.dimension_semantics<parallel>], iteration_bounds = array<i64: 1>, scalar_prefetch = 0 : i64, scratch_operands = 0 : i64, tpu.core_type = #tpu.core_type<tc>, window_params = [{transform_indices = @transform_0, window_bounds = array<i64: 8, 128>}, {pipeline_mode = #tpu.pipeline_mode<synchronous>, transform_indices = @transform_1, window_bounds = array<i64: 128, 128>}, {pipeline_mode = #tpu.pipeline_mode<synchronous>, transform_indices = @transform_2, window_bounds = array<i64: 128, 128>}, {pipeline_mode = #tpu.pipeline_mode<synchronous>, transform_indices = @transform_3, window_bounds = array<i64: 128, 128>}, {pipeline_mode = #tpu.pipeline_mode<synchronous>, transform_indices = @transform_4, window_bounds = array<i64: 1, 128>}, {pipeline_mode = #tpu.pipeline_mode<synchronous>, transform_indices = @transform_5, window_bounds = array<i64: 1, 128>}, {pipeline_mode = #tpu.pipeline_mode<synchronous>, transform_indices = @transform_6, window_bounds = array<i64: 1, 128>}, {transform_indices = @transform_7, window_bounds = array<i64: 8, 128>}]} {
    %c0 = arith.constant 0 : index
    %c0_0 = arith.constant 0 : index
    %0 = vector.load %arg1[%c0, %c0_0] : memref<8x128xf32, #tpu.memory_space<vmem>>, vector<8x128xf32>
    %c0_1 = arith.constant 0 : index
    %c0_2 = arith.constant 0 : index
    %1 = vector.load %arg2[%c0_1, %c0_2] : memref<128x128xf32, #tpu.memory_space<vmem>>, vector<128x128xf32>
    %c0_3 = arith.constant 0 : index
    %c0_4 = arith.constant 0 : index
    %2 = vector.load %arg5[%c0_3, %c0_4] : memref<1x128xf32, #tpu.memory_space<vmem>>, vector<1x128xf32>
    %cst = arith.constant dense<0.000000e+00> : vector<8x128xf32>
    %3 = tpu.matmul %0, %1, %cst {dimension_numbers = #tpu.dot_dimension_numbers<[1], [0], [0], [1], [0, 0, 1, 1], [], []>} : vector<8x128xf32>, vector<128x128xf32>, vector<8x128xf32> -> vector<8x128xf32>
    %4 = vector.broadcast %2 : vector<1x128xf32> to vector<8x128xf32>
    %5 = arith.addf %3, %4 : vector<8x128xf32>
    %cst_5 = arith.constant 0.000000e+00 : f32
    %6 = vector.broadcast %cst_5 : f32 to vector<8x128xf32>
    %7 = arith.maximumf %5, %6 : vector<8x128xf32>
    %c0_6 = arith.constant 0 : index
    %c0_7 = arith.constant 0 : index
    %8 = vector.load %arg3[%c0_6, %c0_7] : memref<128x128xf32, #tpu.memory_space<vmem>>, vector<128x128xf32>
    %c0_8 = arith.constant 0 : index
    %c0_9 = arith.constant 0 : index
    %9 = vector.load %arg6[%c0_8, %c0_9] : memref<1x128xf32, #tpu.memory_space<vmem>>, vector<1x128xf32>
    %cst_10 = arith.constant dense<0.000000e+00> : vector<8x128xf32>
    %10 = tpu.matmul %7, %8, %cst_10 {dimension_numbers = #tpu.dot_dimension_numbers<[1], [0], [0], [1], [0, 0, 1, 1], [], []>} : vector<8x128xf32>, vector<128x128xf32>, vector<8x128xf32> -> vector<8x128xf32>
    %11 = vector.broadcast %9 : vector<1x128xf32> to vector<8x128xf32>
    %12 = arith.addf %10, %11 : vector<8x128xf32>
    %cst_11 = arith.constant 0.000000e+00 : f32
    %13 = vector.broadcast %cst_11 : f32 to vector<8x128xf32>
    %14 = arith.maximumf %12, %13 : vector<8x128xf32>
    %c0_12 = arith.constant 0 : index
    %c0_13 = arith.constant 0 : index
    %15 = vector.load %arg4[%c0_12, %c0_13] : memref<128x128xf32, #tpu.memory_space<vmem>>, vector<128x128xf32>
    %c0_14 = arith.constant 0 : index
    %c0_15 = arith.constant 0 : index
    %16 = vector.load %arg7[%c0_14, %c0_15] : memref<1x128xf32, #tpu.memory_space<vmem>>, vector<1x128xf32>
    %cst_16 = arith.constant dense<0.000000e+00> : vector<8x128xf32>
    %17 = tpu.matmul %14, %15, %cst_16 {dimension_numbers = #tpu.dot_dimension_numbers<[1], [0], [0], [1], [0, 0, 1, 1], [], []>} : vector<8x128xf32>, vector<128x128xf32>, vector<8x128xf32> -> vector<8x128xf32>
    %18 = vector.broadcast %16 : vector<1x128xf32> to vector<8x128xf32>
    %19 = arith.addf %17, %18 : vector<8x128xf32>
    %c0_17 = arith.constant 0 : index
    %c0_18 = arith.constant 0 : index
    %20 = vector.load %arg8[%c0_17, %c0_18] : memref<8x128xf32, #tpu.memory_space<vmem>>, vector<8x128xf32>
    tpu.vector_store %arg8[%c0_17, %c0_18], %19 {strides = array<i32>} : memref<8x128xf32, #tpu.memory_space<vmem>>, vector<8x128xf32>,
    return
  }
  func.func @transform_0(%arg0: i32) -> (i32, i32) {
    %c0_i32 = arith.constant 0 : i32
    %c0_i32_0 = arith.constant 0 : i32
    return %arg0, %c0_i32 : i32, i32
  }
  func.func @transform_1(%arg0: i32) -> (i32, i32) {
    %c0_i32 = arith.constant 0 : i32
    %c0_i32_0 = arith.constant 0 : i32
    %c0_i32_1 = arith.constant 0 : i32
    return %c0_i32, %c0_i32_0 : i32, i32
  }
  func.func @transform_2(%arg0: i32) -> (i32, i32) {
    %c0_i32 = arith.constant 0 : i32
    %c0_i32_0 = arith.constant 0 : i32
    %c0_i32_1 = arith.constant 0 : i32
    return %c0_i32, %c0_i32_0 : i32, i32
  }
  func.func @transform_3(%arg0: i32) -> (i32, i32) {
    %c0_i32 = arith.constant 0 : i32
    %c0_i32_0 = arith.constant 0 : i32
    %c0_i32_1 = arith.constant 0 : i32
    return %c0_i32, %c0_i32_0 : i32, i32
  }
  func.func @transform_4(%arg0: i32) -> (i32, i32) {
    %c0_i32 = arith.constant 0 : i32
    %c0_i32_0 = arith.constant 0 : i32
    %c0_i32_1 = arith.constant 0 : i32
    return %c0_i32, %c0_i32_0 : i32, i32
  }
  func.func @transform_5(%arg0: i32) -> (i32, i32) {
    %c0_i32 = arith.constant 0 : i32
    %c0_i32_0 = arith.constant 0 : i32
    %c0_i32_1 = arith.constant 0 : i32
    return %c0_i32, %c0_i32_0 : i32, i32
  }
  func.func @transform_6(%arg0: i32) -> (i32, i32) {
    %c0_i32 = arith.constant 0 : i32
    %c0_i32_0 = arith.constant 0 : i32
    %c0_i32_1 = arith.constant 0 : i32
    return %c0_i32, %c0_i32_0 : i32, i32
  }
  func.func @transform_7(%arg0: i32) -> (i32, i32) {
    %c0_i32 = arith.constant 0 : i32
    %c0_i32_0 = arith.constant 0 : i32
    return %arg0, %c0_i32 : i32, i32
  }
}

</mosaic_0001>

<llo_original>
// kernel: tpu_custom_call.1
$region0: #{tpu_custom_call.1}
  #allocation0 [shape = 'u32[]', space=smem, size = 0x4, offset = 0x4, fixed_abs, tag = 'smem constant byte address 0x4 - core index']
  #allocation1 [shape = 'u32[144,128]{1,0:T(1,128)}', space=vmem, size = 0x12000, scoped, tag = 'internal scratch']
  %s0 = inlined_call_operand.hbm [shape: f32[8,128], index: 0, kind: input, shape index: {}]
  %s1 = inlined_call_operand.hbm [shape: f32[128,128], index: 1, kind: input, shape index: {}]
  %s2 = inlined_call_operand.hbm [shape: f32[128,128], index: 2, kind: input, shape index: {}]
  %s3 = inlined_call_operand.hbm [shape: f32[128,128], index: 3, kind: input, shape index: {}]
  %s4 = inlined_call_operand.vmem [shape: f32[1,128], index: 4, kind: input, shape index: {}]
  %s5 = inlined_call_operand.vmem [shape: f32[1,128], index: 5, kind: input, shape index: {}]
  %s6 = inlined_call_operand.vmem [shape: f32[1,128], index: 6, kind: input, shape index: {}]
  %s7 = inlined_call_operand.hbm [shape: f32[8,128], index: 7, kind: output, shape index: {}]
  %s8 = sld [smem:[#allocation0]]
  $region54: #{tpu_custom_call.1} parent=0
    _
  %s10 = ssub.s32 1, %s8
  %s11 = scalar_select 0, %s10, %s8
  $region1: #{tpu_custom_call.1} parent=0
    #allocation2 [shape = 'u8[4096]{0}', space=vmem, size = 0x1000, scoped, tag = 'input window, operand 0, single buffered']
    #allocation3 [shape = 's32[1]{0}', space=sflag, size = 0x4, scoped, tag = 'scoped memory for tpu_custom_call.1']
    #allocation4 [shape = 's32[1]{0}', space=sflag, size = 0x4, scoped, tag = 'scoped memory for tpu_custom_call.1']
    #allocation5 [shape = 'u8[65536]{0}', space=vmem, size = 0x10000, scoped, tag = 'input window, operand 1, single buffered']
    #allocation6 [shape = 's32[1]{0}', space=sflag, size = 0x4, scoped, tag = 'scoped memory for tpu_custom_call.1']
    #allocation7 [shape = 'u8[65536]{0}', space=vmem, size = 0x10000, scoped, tag = 'input window, operand 2, single buffered']
    #allocation8 [shape = 'u8[65536]{0}', space=vmem, size = 0x10000, scoped, tag = 'input window, operand 3, single buffered']
    #allocation9 [shape = 's32[1]{0}', space=sflag, size = 0x4, scoped, tag = 'scoped memory for tpu_custom_call.1']
    #allocation10 [shape = 'u8[4096]{0}', space=vmem, size = 0x1000, scoped, tag = 'output window, operand 0, single buffered']
    %12 = vsyncpa [#allocation3], 0
    %13 = vsyncpa [#allocation6], 0
    %14 = vsyncpa [#allocation9], 0
    %15 = vsyncpa [#allocation4], 0
    // Predicated region
    $region2: #{tpu_custom_call.1} parent=1 // pred_check
      _
    $region3: #{tpu_custom_call.1} parent=1 // pred_check_branch
      %17 = sbr.rel (0) target = $region5
    $region4: #{tpu_custom_call.1} parent=1 // pred_region
      %s19 = ssub.s32 128, 128
      %20 = vsyncadd [#allocation3], %s19
      %s22 = sshll.u32 [#allocation2], 4
      %s23 = int_to_ptr.vmem [resolvable:$true] %s22
      %25 = dma.hbm_to_vmem [thread:$0]  %s0, 128, %s23, [#allocation3]
    $region5: #{tpu_custom_call.1} parent=1 // pred_fallthru
      _
    // Predicated region
    $region6: #{tpu_custom_call.1} parent=1 // pred_check
      _
    $region7: #{tpu_custom_call.1} parent=1 // pred_check_branch
      %27 = sbr.rel (0) target = $region9
    $region8: #{tpu_custom_call.1} parent=1 // pred_region
      %s29 = ssub.s32 2048, 2048
      %30 = vsyncadd [#allocation6], %s29
      %s31 = sshll.u32 [#allocation5], 4
      %s32 = int_to_ptr.vmem [resolvable:$true] %s31
      %37 = dma.hbm_to_vmem [thread:$0]  %s1, 2048, %s32, [#allocation6], 128, 128, 8
    $region9: #{tpu_custom_call.1} parent=1 // pred_fallthru
      _
    // Predicated region
    $region10: #{tpu_custom_call.1} parent=1 // pred_check
      _
    $region11: #{tpu_custom_call.1} parent=1 // pred_check_branch
      %39 = sbr.rel (0) target = $region13
    $region12: #{tpu_custom_call.1} parent=1 // pred_region
      %s41 = ssub.s32 2048, 2048
      %42 = vsyncadd [#allocation6], %s41
      %s43 = sshll.u32 [#allocation7], 4
      %s44 = int_to_ptr.vmem [resolvable:$true] %s43
      %49 = dma.hbm_to_vmem [thread:$0]  %s2, 2048, %s44, [#allocation6], 128, 128, 8
    $region13: #{tpu_custom_call.1} parent=1 // pred_fallthru
      _
    // Predicated region
    $region14: #{tpu_custom_call.1} parent=1 // pred_check
      _
    $region15: #{tpu_custom_call.1} parent=1 // pred_check_branch
      %51 = sbr.rel (0) target = $region17
    $region16: #{tpu_custom_call.1} parent=1 // pred_region
      %s53 = ssub.s32 2048, 2048
      %54 = vsyncadd [#allocation9], %s53
      %s55 = sshll.u32 [#allocation8], 4
      %s56 = int_to_ptr.vmem [resolvable:$true] %s55
      %61 = dma.hbm_to_vmem [thread:$0]  %s3, 2048, %s56, [#allocation9], 128, 128, 8
    $region17: #{tpu_custom_call.1} parent=1 // pred_fallthru
      _
    // Predicated region
    $region18: #{tpu_custom_call.1} parent=1 // pred_check
      _
    $region19: #{tpu_custom_call.1} parent=1 // pred_check_branch
      %63 = sbr.rel (0) target = $region21
    $region20: #{tpu_custom_call.1} parent=1 // pred_region
      _
    $region21: #{tpu_custom_call.1} parent=1 // pred_fallthru
      _
    // Predicated region
    $region22: #{tpu_custom_call.1} parent=1 // pred_check
      _
    $region23: #{tpu_custom_call.1} parent=1 // pred_check_branch
      %65 = sbr.rel (0) target = $region25
    $region24: #{tpu_custom_call.1} parent=1 // pred_region
      _
    $region25: #{tpu_custom_call.1} parent=1 // pred_fallthru
      _
    // Predicated region
    $region26: #{tpu_custom_call.1} parent=1 // pred_check
      _
    $region27: #{tpu_custom_call.1} parent=1 // pred_check_branch
      %67 = sbr.rel (0) target = $region29
    $region28: #{tpu_custom_call.1} parent=1 // pred_region
      _
    $region29: #{tpu_custom_call.1} parent=1 // pred_fallthru
      _
    // Predicated region
    $region30: #{tpu_custom_call.1} parent=1 // pred_check
      _
    $region31: #{tpu_custom_call.1} parent=1 // pred_check_branch
      %69 = sbr.rel (0) target = $region33
    $region32: #{tpu_custom_call.1} parent=1 // pred_region
      %70 = dma.done [#allocation3], 128
    $region33: #{tpu_custom_call.1} parent=1 // pred_fallthru
      _
    // Predicated region
    $region34: #{tpu_custom_call.1} parent=1 // pred_check
      _
    $region35: #{tpu_custom_call.1} parent=1 // pred_check_branch
      %72 = sbr.rel (0) target = $region37
    $region36: #{tpu_custom_call.1} parent=1 // pred_region
      %73 = dma.done [#allocation6], 2048
    $region37: #{tpu_custom_call.1} parent=1 // pred_fallthru
      _
    // Predicated region
    $region38: #{tpu_custom_call.1} parent=1 // pred_check
      _
    $region39: #{tpu_custom_call.1} parent=1 // pred_check_branch
      %75 = sbr.rel (0) target = $region41
    $region40: #{tpu_custom_call.1} parent=1 // pred_region
      %76 = dma.done [#allocation6], 2048
    $region41: #{tpu_custom_call.1} parent=1 // pred_fallthru
      _
    // Predicated region
    $region42: #{tpu_custom_call.1} parent=1 // pred_check
      _
    $region43: #{tpu_custom_call.1} parent=1 // pred_check_branch
      %78 = sbr.rel (0) target = $region45
    $region44: #{tpu_custom_call.1} parent=1 // pred_region
      %79 = dma.done [#allocation9], 2048
    $region45: #{tpu_custom_call.1} parent=1 // pred_fallthru
      _
    %v80 = vld [vmem:[#allocation2] sm:$0xff]
    %v81 = vld [vmem:[#allocation5] sm:$0xff]
    %v82 = vld [vmem:[#allocation5 + $0x8] sm:$0xff]
    %v83 = vld [vmem:[#allocation5 + $0x10] sm:$0xff]
    %v84 = vld [vmem:[#allocation5 + $0x18] sm:$0xff]
    %v85 = vld [vmem:[#allocation5 + $0x20] sm:$0xff]
    %v86 = vld [vmem:[#allocation5 + $0x28] sm:$0xff]
    %v87 = vld [vmem:[#allocation5 + $0x30] sm:$0xff]
    %v88 = vld [vmem:[#allocation5 + $0x38] sm:$0xff]
    %v89 = vld [vmem:[#allocation5 + $0x40] sm:$0xff]
    %v90 = vld [vmem:[#allocation5 + $0x48] sm:$0xff]
    %v91 = vld [vmem:[#allocation5 + $0x50] sm:$0xff]
    %v92 = vld [vmem:[#allocation5 + $0x58] sm:$0xff]
    %v93 = vld [vmem:[#allocation5 + $0x60] sm:$0xff]
    %v94 = vld [vmem:[#allocation5 + $0x68] sm:$0xff]
    %v95 = vld [vmem:[#allocation5 + $0x70] sm:$0xff]
    %v96 = vld [vmem:[#allocation5 + $0x78] sm:$0xff]
    %v97 = vld [vmem:[%s4] sm:$0x1]
    %v99 = vlaneseq
    %v100 = vshrl.u32 %v99, 7
    %v101 = vsub.s32 0, %v100
    %v102 = vrot.slane %v97, %v101
    %104 = vmatprep.subr.mxu0 0.0
    %105 = vmatpush1.msra.mxu0 %v81
    %106 = vmatprep.subr.mxu0 0.0
    %107 = vmatpush1.msra.mxu0 %v82
    %108 = vmatprep.subr.mxu0 0.0
    %109 = vmatpush1.msra.mxu0 %v83
    %110 = vmatprep.subr.mxu0 0.0
    %111 = vmatpush1.msra.mxu0 %v84
    %112 = vmatprep.subr.mxu0 0.0
    %113 = vmatpush1.msra.mxu0 %v85
    %114 = vmatprep.subr.mxu0 0.0
    %115 = vmatpush1.msra.mxu0 %v86
    %116 = vmatprep.subr.mxu0 0.0
    %117 = vmatpush1.msra.mxu0 %v87
    %118 = vmatprep.subr.mxu0 0.0
    %119 = vmatpush1.msra.mxu0 %v88
    %120 = vmatprep.subr.mxu0 0.0
    %121 = vmatpush1.msra.mxu0 %v89
    %122 = vmatprep.subr.mxu0 0.0
    %123 = vmatpush1.msra.mxu0 %v90
    %124 = vmatprep.subr.mxu0 0.0
    %125 = vmatpush1.msra.mxu0 %v91
    %126 = vmatprep.subr.mxu0 0.0
    %127 = vmatpush1.msra.mxu0 %v92
    %128 = vmatprep.subr.mxu0 0.0
    %129 = vmatpush1.msra.mxu0 %v93
    %130 = vmatprep.subr.mxu0 0.0
    %131 = vmatpush1.msra.mxu0 %v94
    %132 = vmatprep.subr.mxu0 0.0
    %133 = vmatpush1.msra.mxu0 %v95
    %134 = vmatprep.subr.mxu0 0.0
    %135 = vmatpush1.msra.mxu0 %v96
    %136 = vmatprep.subr.mxu0 0.0
    %137 = vmatpush1.msra.mxu0 0.0
    %138 = vmatprep.subr.mxu0 0.0
    %139 = vmatpush1.msra.mxu0 0.0
    %140 = vmatprep.subr.mxu0 0.0
    %141 = vmatpush1.msra.mxu0 0.0
    %142 = vmatprep.subr.mxu0 0.0
    %143 = vmatpush1.msra.mxu0 0.0
    %144 = vmatprep.subr.mxu0 0.0
    %145 = vmatpush1.msra.mxu0 0.0
    %146 = vmatprep.subr.mxu0 0.0
    %147 = vmatpush1.msra.mxu0 0.0
    %148 = vmatprep.subr.mxu0 0.0
    %149 = vmatpush1.msra.mxu0 0.0
    %150 = vmatprep.subr.mxu0 0.0
    %151 = vmatpush1.msra.mxu0 0.0
    %152 = vmatprep.subr.mxu0 0.0
    %153 = vmatpush1.msra.mxu0 0.0
    %154 = vmatprep.subr.mxu0 0.0
    %155 = vmatpush1.msra.mxu0 0.0
    %156 = vmatprep.subr.mxu0 0.0
    %157 = vmatpush1.msra.mxu0 0.0
    %158 = vmatprep.subr.mxu0 0.0
    %159 = vmatpush1.msra.mxu0 0.0
    %160 = vmatprep.subr.mxu0 0.0
    %161 = vmatpush1.msra.mxu0 0.0
    %162 = vmatprep.subr.mxu0 0.0
    %163 = vmatpush1.msra.mxu0 0.0
    %164 = vmatprep.subr.mxu0 0.0
    %165 = vmatpush1.msra.mxu0 0.0
    %166 = vmatprep.subr.mxu0 0.0
    %167 = vmatpush1.msra.mxu0 0.0
    %168 = vmatprep.mubr.f32.mxu0 0.0
    %169 = vmatmul.mubr.f32.gmra.mrb[0].mxu0 %v80
    %v170 = vpop.f32.mrb[0].mxu0
    %v171 = vadd.f32 %v102, %v170
    %v172 = vpop.f32.mrb[0].mxu0
    %173 = vdwg.mxu0
    %v174 = vmax.f32 %v171, 0.0
    %v175 = vld [vmem:[#allocation7] sm:$0xff]
    %v176 = vld [vmem:[#allocation7 + $0x8] sm:$0xff]
    %v177 = vld [vmem:[#allocation7 + $0x10] sm:$0xff]
    %v178 = vld [vmem:[#allocation7 + $0x18] sm:$0xff]
    %v179 = vld [vmem:[#allocation7 + $0x20] sm:$0xff]
    %v180 = vld [vmem:[#allocation7 + $0x28] sm:$0xff]
    %v181 = vld [vmem:[#allocation7 + $0x30] sm:$0xff]
    %v182 = vld [vmem:[#allocation7 + $0x38] sm:$0xff]
    %v183 = vld [vmem:[#allocation7 + $0x40] sm:$0xff]
    %v184 = vld [vmem:[#allocation7 + $0x48] sm:$0xff]
    %v185 = vld [vmem:[#allocation7 + $0x50] sm:$0xff]
    %v186 = vld [vmem:[#allocation7 + $0x58] sm:$0xff]
    %v187 = vld [vmem:[#allocation7 + $0x60] sm:$0xff]
    %v188 = vld [vmem:[#allocation7 + $0x68] sm:$0xff]
    %v189 = vld [vmem:[#allocation7 + $0x70] sm:$0xff]
    %v190 = vld [vmem:[#allocation7 + $0x78] sm:$0xff]
    %v191 = vld [vmem:[%s5] sm:$0x1]
    %v193 = vlaneseq
    %v194 = vshrl.u32 %v193, 7
    %v195 = vsub.s32 0, %v194
    %v196 = vrot.slane %v191, %v195
    %198 = vmatprep.subr.mxu0 0.0
    %199 = vmatpush1.msra.mxu0 %v175
    %200 = vmatprep.subr.mxu0 0.0
    %201 = vmatpush1.msra.mxu0 %v176
    %202 = vmatprep.subr.mxu0 0.0
    %203 = vmatpush1.msra.mxu0 %v177
    %204 = vmatprep.subr.mxu0 0.0
    %205 = vmatpush1.msra.mxu0 %v178
    %206 = vmatprep.subr.mxu0 0.0
    %207 = vmatpush1.msra.mxu0 %v179
    %208 = vmatprep.subr.mxu0 0.0
    %209 = vmatpush1.msra.mxu0 %v180
    %210 = vmatprep.subr.mxu0 0.0
    %211 = vmatpush1.msra.mxu0 %v181
    %212 = vmatprep.subr.mxu0 0.0
    %213 = vmatpush1.msra.mxu0 %v182
    %214 = vmatprep.subr.mxu0 0.0
    %215 = vmatpush1.msra.mxu0 %v183
    %216 = vmatprep.subr.mxu0 0.0
    %217 = vmatpush1.msra.mxu0 %v184
    %218 = vmatprep.subr.mxu0 0.0
    %219 = vmatpush1.msra.mxu0 %v185
    %220 = vmatprep.subr.mxu0 0.0
    %221 = vmatpush1.msra.mxu0 %v186
    %222 = vmatprep.subr.mxu0 0.0
    %223 = vmatpush1.msra.mxu0 %v187
    %224 = vmatprep.subr.mxu0 0.0
    %225 = vmatpush1.msra.mxu0 %v188
    %226 = vmatprep.subr.mxu0 0.0
    %227 = vmatpush1.msra.mxu0 %v189
    %228 = vmatprep.subr.mxu0 0.0
    %229 = vmatpush1.msra.mxu0 %v190
    %230 = vmatprep.subr.mxu0 0.0
    %231 = vmatpush1.msra.mxu0 0.0
    %232 = vmatprep.subr.mxu0 0.0
    %233 = vmatpush1.msra.mxu0 0.0
    %234 = vmatprep.subr.mxu0 0.0
    %235 = vmatpush1.msra.mxu0 0.0
    %236 = vmatprep.subr.mxu0 0.0
    %237 = vmatpush1.msra.mxu0 0.0
    %238 = vmatprep.subr.mxu0 0.0
    %239 = vmatpush1.msra.mxu0 0.0
    %240 = vmatprep.subr.mxu0 0.0
    %241 = vmatpush1.msra.mxu0 0.0
    %242 = vmatprep.subr.mxu0 0.0
    %243 = vmatpush1.msra.mxu0 0.0
    %244 = vmatprep.subr.mxu0 0.0
    %245 = vmatpush1.msra.mxu0 0.0
    %246 = vmatprep.subr.mxu0 0.0
    %247 = vmatpush1.msra.mxu0 0.0
    %248 = vmatprep.subr.mxu0 0.0
    %249 = vmatpush1.msra.mxu0 0.0
    %250 = vmatprep.subr.mxu0 0.0
    %251 = vmatpush1.msra.mxu0 0.0
    %252 = vmatprep.subr.mxu0 0.0
    %253 = vmatpush1.msra.mxu0 0.0
    %254 = vmatprep.subr.mxu0 0.0
    %255 = vmatpush1.msra.mxu0 0.0
    %256 = vmatprep.subr.mxu0 0.0
    %257 = vmatpush1.msra.mxu0 0.0
    %258 = vmatprep.subr.mxu0 0.0
    %259 = vmatpush1.msra.mxu0 0.0
    %260 = vmatprep.subr.mxu0 0.0
    %261 = vmatpush1.msra.mxu0 0.0
    %262 = vmatprep.mubr.f32.mxu0 0.0
    %263 = vmatmul.mubr.f32.gmra.mrb[0].mxu0 %v174
    %v264 = vpop.f32.mrb[0].mxu0
    %v265 = vadd.f32 %v196, %v264
    %v266 = vpop.f32.mrb[0].mxu0
    %267 = vdwg.mxu0
    %v268 = vmax.f32 %v265, 0.0
    %v269 = vld [vmem:[#allocation8] sm:$0xff]
    %v270 = vld [vmem:[#allocation8 + $0x8] sm:$0xff]
    %v271 = vld [vmem:[#allocation8 + $0x10] sm:$0xff]
    %v272 = vld [vmem:[#allocation8 + $0x18] sm:$0xff]
    %v273 = vld [vmem:[#allocation8 + $0x20] sm:$0xff]
    %v274 = vld [vmem:[#allocation8 + $0x28] sm:$0xff]
    %v275 = vld [vmem:[#allocation8 + $0x30] sm:$0xff]
    %v276 = vld [vmem:[#allocation8 + $0x38] sm:$0xff]
    %v277 = vld [vmem:[#allocation8 + $0x40] sm:$0xff]
    %v278 = vld [vmem:[#allocation8 + $0x48] sm:$0xff]
    %v279 = vld [vmem:[#allocation8 + $0x50] sm:$0xff]
    %v280 = vld [vmem:[#allocation8 + $0x58] sm:$0xff]
    %v281 = vld [vmem:[#allocation8 + $0x60] sm:$0xff]
    %v282 = vld [vmem:[#allocation8 + $0x68] sm:$0xff]
    %v283 = vld [vmem:[#allocation8 + $0x70] sm:$0xff]
    %v284 = vld [vmem:[#allocation8 + $0x78] sm:$0xff]
    %v285 = vld [vmem:[%s6] sm:$0x1]
    %v287 = vlaneseq
    %v288 = vshrl.u32 %v287, 7
    %v289 = vsub.s32 0, %v288
    %v290 = vrot.slane %v285, %v289
    %292 = vmatprep.subr.mxu0 0.0
    %293 = vmatpush1.msra.mxu0 %v269
    %294 = vmatprep.subr.mxu0 0.0
    %295 = vmatpush1.msra.mxu0 %v270
    %296 = vmatprep.subr.mxu0 0.0
    %297 = vmatpush1.msra.mxu0 %v271
    %298 = vmatprep.subr.mxu0 0.0
    %299 = vmatpush1.msra.mxu0 %v272
    %300 = vmatprep.subr.mxu0 0.0
    %301 = vmatpush1.msra.mxu0 %v273
    %302 = vmatprep.subr.mxu0 0.0
    %303 = vmatpush1.msra.mxu0 %v274
    %304 = vmatprep.subr.mxu0 0.0
    %305 = vmatpush1.msra.mxu0 %v275
    %306 = vmatprep.subr.mxu0 0.0
    %307 = vmatpush1.msra.mxu0 %v276
    %308 = vmatprep.subr.mxu0 0.0
    %309 = vmatpush1.msra.mxu0 %v277
    %310 = vmatprep.subr.mxu0 0.0
    %311 = vmatpush1.msra.mxu0 %v278
    %312 = vmatprep.subr.mxu0 0.0
    %313 = vmatpush1.msra.mxu0 %v279
    %314 = vmatprep.subr.mxu0 0.0
    %315 = vmatpush1.msra.mxu0 %v280
    %316 = vmatprep.subr.mxu0 0.0
    %317 = vmatpush1.msra.mxu0 %v281
    %318 = vmatprep.subr.mxu0 0.0
    %319 = vmatpush1.msra.mxu0 %v282
    %320 = vmatprep.subr.mxu0 0.0
    %321 = vmatpush1.msra.mxu0 %v283
    %322 = vmatprep.subr.mxu0 0.0
    %323 = vmatpush1.msra.mxu0 %v284
    %324 = vmatprep.subr.mxu0 0.0
    %325 = vmatpush1.msra.mxu0 0.0
    %326 = vmatprep.subr.mxu0 0.0
    %327 = vmatpush1.msra.mxu0 0.0
    %328 = vmatprep.subr.mxu0 0.0
    %329 = vmatpush1.msra.mxu0 0.0
    %330 = vmatprep.subr.mxu0 0.0
    %331 = vmatpush1.msra.mxu0 0.0
    %332 = vmatprep.subr.mxu0 0.0
    %333 = vmatpush1.msra.mxu0 0.0
    %334 = vmatprep.subr.mxu0 0.0
    %335 = vmatpush1.msra.mxu0 0.0
    %336 = vmatprep.subr.mxu0 0.0
    %337 = vmatpush1.msra.mxu0 0.0
    %338 = vmatprep.subr.mxu0 0.0
    %339 = vmatpush1.msra.mxu0 0.0
    %340 = vmatprep.subr.mxu0 0.0
    %341 = vmatpush1.msra.mxu0 0.0
    %342 = vmatprep.subr.mxu0 0.0
    %343 = vmatpush1.msra.mxu0 0.0
    %344 = vmatprep.subr.mxu0 0.0
    %345 = vmatpush1.msra.mxu0 0.0
    %346 = vmatprep.subr.mxu0 0.0
    %347 = vmatpush1.msra.mxu0 0.0
    %348 = vmatprep.subr.mxu0 0.0
    %349 = vmatpush1.msra.mxu0 0.0
    %350 = vmatprep.subr.mxu0 0.0
    %351 = vmatpush1.msra.mxu0 0.0
    %352 = vmatprep.subr.mxu0 0.0
    %353 = vmatpush1.msra.mxu0 0.0
    %354 = vmatprep.subr.mxu0 0.0
    %355 = vmatpush1.msra.mxu0 0.0
    %356 = vmatprep.mubr.f32.mxu0 0.0
    %357 = vmatmul.mubr.f32.gmra.mrb[0].mxu0 %v268
    %v358 = vpop.f32.mrb[0].mxu0
    %v359 = vadd.f32 %v290, %v358
    %v360 = vpop.f32.mrb[0].mxu0
    %361 = vdwg.mxu0
    %362 = vst [vmem:[#allocation10] sm:$0xff] %v359
    // Predicated region
    $region46: #{tpu_custom_call.1} parent=1 // pred_check
      _
    $region47: #{tpu_custom_call.1} parent=1 // pred_check_branch
      %364 = sbr.rel (0) target = $region49
    $region48: #{tpu_custom_call.1} parent=1 // pred_region
      %s366 = ssub.s32 128, 128
      %367 = vsyncadd [#allocation4], %s366
      %s369 = sshll.u32 [#allocation10], 4
      %s370 = int_to_ptr.vmem [resolvable:$true] %s369
      %372 = dma.vmem_to_hbm [thread:$0]  %s370, 128, %s7, [#allocation4]
    $region49: #{tpu_custom_call.1} parent=1 // pred_fallthru
      _
    // Predicated region
    $region50: #{tpu_custom_call.1} parent=1 // pred_check
      _
    $region51: #{tpu_custom_call.1} parent=1 // pred_check_branch
      %374 = sbr.rel (0) target = $region53
    $region52: #{tpu_custom_call.1} parent=1 // pred_region
      %375 = dma.done [#allocation4], 128
    $region53: #{tpu_custom_call.1} parent=1 // pred_fallthru
      _
    %376 = vsyncpa [#allocation3], 1
    %377 = vsyncpa [#allocation6], 1
    %378 = vsyncpa [#allocation9], 1
    %379 = vsyncpa [#allocation4], 1

// kernel: tpu_custom_call.1
$region0: #{tpu_custom_call.1}
  #allocation0 [shape = 'u32[]', space=smem, size = 0x4, offset = 0x4, fixed_abs, tag = 'smem constant byte address 0x4 - core index']
  #allocation1 [shape = 'u32[144,128]{1,0:T(1,128)}', space=vmem, size = 0x12000, scoped, tag = 'internal scratch']
  %s0 = inlined_call_operand.hbm [shape: f32[8,128], index: 0, kind: input, shape index: {}]
  %s1 = inlined_call_operand.hbm [shape: f32[128,128], index: 1, kind: input, shape index: {}]
  %s2 = inlined_call_operand.hbm [shape: f32[128,128], index: 2, kind: input, shape index: {}]
  %s3 = inlined_call_operand.hbm [shape: f32[128,128], index: 3, kind: input, shape index: {}]
  %s4 = inlined_call_operand.vmem [shape: f32[1,128], index: 4, kind: input, shape index: {}]
  %s5 = inlined_call_operand.vmem [shape: f32[1,128], index: 5, kind: input, shape index: {}]
  %s6 = inlined_call_operand.vmem [shape: f32[1,128], index: 6, kind: input, shape index: {}]
  %s7 = inlined_call_operand.hbm [shape: f32[8,128], index: 7, kind: output, shape index: {}]
  %s8 = sld [smem:[#allocation0]]
  $region54: #{tpu_custom_call.1} parent=0
    _
  %s10 = ssub.s32 1, %s8
  %s11 = scalar_select 0, %s10, %s8
  $region1: #{tpu_custom_call.1} parent=0
    #allocation2 [shape = 'u8[4096]{0}', space=vmem, size = 0x1000, scoped, tag = 'input window, operand 0, single buffered']
    #allocation3 [shape = 's32[1]{0}', space=sflag, size = 0x4, scoped, tag = 'scoped memory for tpu_custom_call.1']
    #allocation4 [shape = 's32[1]{0}', space=sflag, size = 0x4, scoped, tag = 'scoped memory for tpu_custom_call.1']
    #allocation5 [shape = 'u8[65536]{0}', space=vmem, size = 0x10000, scoped, tag = 'input window, operand 1, single buffered']
    #allocation6 [shape = 's32[1]{0}', space=sflag, size = 0x4, scoped, tag = 'scoped memory for tpu_custom_call.1']
    #allocation7 [shape = 'u8[65536]{0}', space=vmem, size = 0x10000, scoped, tag = 'input window, operand 2, single buffered']
    #allocation8 [shape = 'u8[65536]{0}', space=vmem, size = 0x10000, scoped, tag = 'input window, operand 3, single buffered']
    #allocation9 [shape = 's32[1]{0}', space=sflag, size = 0x4, scoped, tag = 'scoped memory for tpu_custom_call.1']
    #allocation10 [shape = 'u8[4096]{0}', space=vmem, size = 0x1000, scoped, tag = 'output window, operand 0, single buffered']
    %12 = vsyncpa [#allocation3], 0
    %13 = vsyncpa [#allocation6], 0
    %14 = vsyncpa [#allocation9], 0
    %15 = vsyncpa [#allocation4], 0
    // Predicated region
    $region2: #{tpu_custom_call.1} parent=1 // pred_check
      _
    $region3: #{tpu_custom_call.1} parent=1 // pred_check_branch
      %17 = sbr.rel (0) target = $region5
    $region4: #{tpu_custom_call.1} parent=1 // pred_region
      %s19 = ssub.s32 128, 128
      %20 = vsyncadd [#allocation3], %s19
      %s22 = sshll.u32 [#allocation2], 4
      %s23 = int_to_ptr.vmem [resolvable:$true] %s22
      %25 = dma.hbm_to_vmem [thread:$0]  %s0, 128, %s23, [#allocation3]
    $region5: #{tpu_custom_call.1} parent=1 // pred_fallthru
      _
    // Predicated region
    $region6: #{tpu_custom_call.1} parent=1 // pred_check
      _
    $region7: #{tpu_custom_call.1} parent=1 // pred_check_branch
      %27 = sbr.rel (0) target = $region9
    $region8: #{tpu_custom_call.1} parent=1 // pred_region
      %s29 = ssub.s32 2048, 2048
      %30 = vsyncadd [#allocation6], %s29
      %s31 = sshll.u32 [#allocation5], 4
      %s32 = int_to_ptr.vmem [resolvable:$true] %s31
      %37 = dma.hbm_to_vmem [thread:$0]  %s1, 2048, %s32, [#allocation6], 128, 128, 8
    $region9: #{tpu_custom_call.1} parent=1 // pred_fallthru
      _
    // Predicated region
    $region10: #{tpu_custom_call.1} parent=1 // pred_check
      _
    $region11: #{tpu_custom_call.1} parent=1 // pred_check_branch
      %39 = sbr.rel (0) target = $region13
    $region12: #{tpu_custom_call.1} parent=1 // pred_region
      %s41 = ssub.s32 2048, 2048
      %42 = vsyncadd [#allocation6], %s41
      %s43 = sshll.u32 [#allocation7], 4
      %s44 = int_to_ptr.vmem [resolvable:$true] %s43
      %49 = dma.hbm_to_vmem [thread:$0]  %s2, 2048, %s44, [#allocation6], 128, 128, 8
    $region13: #{tpu_custom_call.1} parent=1 // pred_fallthru
      _
    // Predicated region
    $region14: #{tpu_custom_call.1} parent=1 // pred_check
      _
    $region15: #{tpu_custom_call.1} parent=1 // pred_check_branch
      %51 = sbr.rel (0) target = $region17
    $region16: #{tpu_custom_call.1} parent=1 // pred_region
      %s53 = ssub.s32 2048, 2048
      %54 = vsyncadd [#allocation9], %s53
      %s55 = sshll.u32 [#allocation8], 4
      %s56 = int_to_ptr.vmem [resolvable:$true] %s55
      %61 = dma.hbm_to_vmem [thread:$0]  %s3, 2048, %s56, [#allocation9], 128, 128, 8
    $region17: #{tpu_custom_call.1} parent=1 // pred_fallthru
      _
    // Predicated region
    $region18: #{tpu_custom_call.1} parent=1 // pred_check
      _
    $region19: #{tpu_custom_call.1} parent=1 // pred_check_branch
      %63 = sbr.rel (0) target = $region21
    $region20: #{tpu_custom_call.1} parent=1 // pred_region
      _
    $region21: #{tpu_custom_call.1} parent=1 // pred_fallthru
      _
    // Predicated region
    $region22: #{tpu_custom_call.1} parent=1 // pred_check
      _
    $region23: #{tpu_custom_call.1} parent=1 // pred_check_branch
      %65 = sbr.rel (0) target = $region25
    $region24: #{tpu_custom_call.1} parent=1 // pred_region
      _
    $region25: #{tpu_custom_call.1} parent=1 // pred_fallthru
      _
    // Predicated region
    $region26: #{tpu_custom_call.1} parent=1 // pred_check
      _
    $region27: #{tpu_custom_call.1} parent=1 // pred_check_branch
      %67 = sbr.rel (0) target = $region29
    $region28: #{tpu_custom_call.1} parent=1 // pred_region
      _
    $region29: #{tpu_custom_call.1} parent=1 // pred_fallthru
      _
    // Predicated region
    $region30: #{tpu_custom_call.1} parent=1 // pred_check
      _
    $region31: #{tpu_custom_call.1} parent=1 // pred_check_branch
      %69 = sbr.rel (0) target = $region33
    $region32: #{tpu_custom_call.1} parent=1 // pred_region
      %70 = dma.done [#allocation3], 128
    $region33: #{tpu_custom_call.1} parent=1 // pred_fallthru
      _
    // Predicated region
    $region34: #{tpu_custom_call.1} parent=1 // pred_check
      _
    $region35: #{tpu_custom_call.1} parent=1 // pred_check_branch
      %72 = sbr.rel (0) target = $region37
    $region36: #{tpu_custom_call.1} parent=1 // pred_region
      %73 = dma.done [#allocation6], 2048
    $region37: #{tpu_custom_call.1} parent=1 // pred_fallthru
      _
    // Predicated region
    $region38: #{tpu_custom_call.1} parent=1 // pred_check
      _
    $region39: #{tpu_custom_call.1} parent=1 // pred_check_branch
      %75 = sbr.rel (0) target = $region41
    $region40: #{tpu_custom_call.1} parent=1 // pred_region
      %76 = dma.done [#allocation6], 2048
    $region41: #{tpu_custom_call.1} parent=1 // pred_fallthru
      _
    // Predicated region
    $region42: #{tpu_custom_call.1} parent=1 // pred_check
      _
    $region43: #{tpu_custom_call.1} parent=1 // pred_check_branch
      %78 = sbr.rel (0) target = $region45
    $region44: #{tpu_custom_call.1} parent=1 // pred_region
      %79 = dma.done [#allocation9], 2048
    $region45: #{tpu_custom_call.1} parent=1 // pred_fallthru
      _
    %v80 = vld [vmem:[#allocation2] sm:$0xff]
    %v81 = vld [vmem:[#allocation5] sm:$0xff]
    %v82 = vld [vmem:[#allocation5 + $0x8] sm:$0xff]
    %v83 = vld [vmem:[#allocation5 + $0x10] sm:$0xff]
    %v84 = vld [vmem:[#allocation5 + $0x18] sm:$0xff]
    %v85 = vld [vmem:[#allocation5 + $0x20] sm:$0xff]
    %v86 = vld [vmem:[#allocation5 + $0x28] sm:$0xff]
    %v87 = vld [vmem:[#allocation5 + $0x30] sm:$0xff]
    %v88 = vld [vmem:[#allocation5 + $0x38] sm:$0xff]
    %v89 = vld [vmem:[#allocation5 + $0x40] sm:$0xff]
    %v90 = vld [vmem:[#allocation5 + $0x48] sm:$0xff]
    %v91 = vld [vmem:[#allocation5 + $0x50] sm:$0xff]
    %v92 = vld [vmem:[#allocation5 + $0x58] sm:$0xff]
    %v93 = vld [vmem:[#allocation5 + $0x60] sm:$0xff]
    %v94 = vld [vmem:[#allocation5 + $0x68] sm:$0xff]
    %v95 = vld [vmem:[#allocation5 + $0x70] sm:$0xff]
    %v96 = vld [vmem:[#allocation5 + $0x78] sm:$0xff]
    %v97 = vld [vmem:[%s4] sm:$0x1]
    %v99 = vlaneseq
    %v100 = vshrl.u32 %v99, 7
    %v101 = vsub.s32 0, %v100
    %v102 = vrot.slane %v97, %v101
    %104 = vmatprep.subr.mxu0 0.0
    %105 = vmatpush1.msra.mxu0 %v81
    %106 = vmatprep.subr.mxu0 0.0
    %107 = vmatpush1.msra.mxu0 %v82
    %108 = vmatprep.subr.mxu0 0.0
    %109 = vmatpush1.msra.mxu0 %v83
    %110 = vmatprep.subr.mxu0 0.0
    %111 = vmatpush1.msra.mxu0 %v84
    %112 = vmatprep.subr.mxu0 0.0
    %113 = vmatpush1.msra.mxu0 %v85
    %114 = vmatprep.subr.mxu0 0.0
    %115 = vmatpush1.msra.mxu0 %v86
    %116 = vmatprep.subr.mxu0 0.0
    %117 = vmatpush1.msra.mxu0 %v87
    %118 = vmatprep.subr.mxu0 0.0
    %119 = vmatpush1.msra.mxu0 %v88
    %120 = vmatprep.subr.mxu0 0.0
    %121 = vmatpush1.msra.mxu0 %v89
    %122 = vmatprep.subr.mxu0 0.0
    %123 = vmatpush1.msra.mxu0 %v90
    %124 = vmatprep.subr.mxu0 0.0
    %125 = vmatpush1.msra.mxu0 %v91
    %126 = vmatprep.subr.mxu0 0.0
    %127 = vmatpush1.msra.mxu0 %v92
    %128 = vmatprep.subr.mxu0 0.0
    %129 = vmatpush1.msra.mxu0 %v93
    %130 = vmatprep.subr.mxu0 0.0
    %131 = vmatpush1.msra.mxu0 %v94
    %132 = vmatprep.subr.mxu0 0.0
    %133 = vmatpush1.msra.mxu0 %v95
    %134 = vmatprep.subr.mxu0 0.0
    %135 = vmatpush1.msra.mxu0 %v96
    %136 = vmatprep.subr.mxu0 0.0
    %137 = vmatpush1.msra.mxu0 0.0
    %138 = vmatprep.subr.mxu0 0.0
    %139 = vmatpush1.msra.mxu0 0.0
    %140 = vmatprep.subr.mxu0 0.0
    %141 = vmatpush1.msra.mxu0 0.0
    %142 = vmatprep.subr.mxu0 0.0
    %143 = vmatpush1.msra.mxu0 0.0
    %144 = vmatprep.subr.mxu0 0.0
    %145 = vmatpush1.msra.mxu0 0.0
    %146 = vmatprep.subr.mxu0 0.0
    %147 = vmatpush1.msra.mxu0 0.0
    %148 = vmatprep.subr.mxu0 0.0
    %149 = vmatpush1.msra.mxu0 0.0
    %150 = vmatprep.subr.mxu0 0.0
    %151 = vmatpush1.msra.mxu0 0.0
    %152 = vmatprep.subr.mxu0 0.0
    %153 = vmatpush1.msra.mxu0 0.0
    %154 = vmatprep.subr.mxu0 0.0
    %155 = vmatpush1.msra.mxu0 0.0
    %156 = vmatprep.subr.mxu0 0.0
    %157 = vmatpush1.msra.mxu0 0.0
    %158 = vmatprep.subr.mxu0 0.0
    %159 = vmatpush1.msra.mxu0 0.0
    %160 = vmatprep.subr.mxu0 0.0
    %161 = vmatpush1.msra.mxu0 0.0
    %162 = vmatprep.subr.mxu0 0.0
    %163 = vmatpush1.msra.mxu0 0.0
    %164 = vmatprep.subr.mxu0 0.0
    %165 = vmatpush1.msra.mxu0 0.0
    %166 = vmatprep.subr.mxu0 0.0
    %167 = vmatpush1.msra.mxu0 0.0
    %168 = vmatprep.mubr.f32.mxu0 0.0
    %169 = vmatmul.mubr.f32.gmra.mrb[0].mxu0 %v80
    %v170 = vpop.f32.mrb[0].mxu0
    %v171 = vadd.f32 %v102, %v170
    %v172 = vpop.f32.mrb[0].mxu0
    %173 = vdwg.mxu0
    %v174 = vmax.f32 %v171, 0.0
    %v175 = vld [vmem:[#allocation7] sm:$0xff]
    %v176 = vld [vmem:[#allocation7 + $0x8] sm:$0xff]
    %v177 = vld [vmem:[#allocation7 + $0x10] sm:$0xff]
    %v178 = vld [vmem:[#allocation7 + $0x18] sm:$0xff]
    %v179 = vld [vmem:[#allocation7 + $0x20] sm:$0xff]
    %v180 = vld [vmem:[#allocation7 + $0x28] sm:$0xff]
    %v181 = vld [vmem:[#allocation7 + $0x30] sm:$0xff]
    %v182 = vld [vmem:[#allocation7 + $0x38] sm:$0xff]
    %v183 = vld [vmem:[#allocation7 + $0x40] sm:$0xff]
    %v184 = vld [vmem:[#allocation7 + $0x48] sm:$0xff]
    %v185 = vld [vmem:[#allocation7 + $0x50] sm:$0xff]
    %v186 = vld [vmem:[#allocation7 + $0x58] sm:$0xff]
    %v187 = vld [vmem:[#allocation7 + $0x60] sm:$0xff]
    %v188 = vld [vmem:[#allocation7 + $0x68] sm:$0xff]
    %v189 = vld [vmem:[#allocation7 + $0x70] sm:$0xff]
    %v190 = vld [vmem:[#allocation7 + $0x78] sm:$0xff]
    %v191 = vld [vmem:[%s5] sm:$0x1]
    %v193 = vlaneseq
    %v194 = vshrl.u32 %v193, 7
    %v195 = vsub.s32 0, %v194
    %v196 = vrot.slane %v191, %v195
    %198 = vmatprep.subr.mxu0 0.0
    %199 = vmatpush1.msra.mxu0 %v175
    %200 = vmatprep.subr.mxu0 0.0
    %201 = vmatpush1.msra.mxu0 %v176
    %202 = vmatprep.subr.mxu0 0.0
    %203 = vmatpush1.msra.mxu0 %v177
    %204 = vmatprep.subr.mxu0 0.0
    %205 = vmatpush1.msra.mxu0 %v178
    %206 = vmatprep.subr.mxu0 0.0
    %207 = vmatpush1.msra.mxu0 %v179
    %208 = vmatprep.subr.mxu0 0.0
    %209 = vmatpush1.msra.mxu0 %v180
    %210 = vmatprep.subr.mxu0 0.0
    %211 = vmatpush1.msra.mxu0 %v181
    %212 = vmatprep.subr.mxu0 0.0
    %213 = vmatpush1.msra.mxu0 %v182
    %214 = vmatprep.subr.mxu0 0.0
    %215 = vmatpush1.msra.mxu0 %v183
    %216 = vmatprep.subr.mxu0 0.0
    %217 = vmatpush1.msra.mxu0 %v184
    %218 = vmatprep.subr.mxu0 0.0
    %219 = vmatpush1.msra.mxu0 %v185
    %220 = vmatprep.subr.mxu0 0.0
    %221 = vmatpush1.msra.mxu0 %v186
    %222 = vmatprep.subr.mxu0 0.0
    %223 = vmatpush1.msra.mxu0 %v187
    %224 = vmatprep.subr.mxu0 0.0
    %225 = vmatpush1.msra.mxu0 %v188
    %226 = vmatprep.subr.mxu0 0.0
    %227 = vmatpush1.msra.mxu0 %v189
    %228 = vmatprep.subr.mxu0 0.0
    %229 = vmatpush1.msra.mxu0 %v190
    %230 = vmatprep.subr.mxu0 0.0
    %231 = vmatpush1.msra.mxu0 0.0
    %232 = vmatprep.subr.mxu0 0.0
    %233 = vmatpush1.msra.mxu0 0.0
    %234 = vmatprep.subr.mxu0 0.0
    %235 = vmatpush1.msra.mxu0 0.0
    %236 = vmatprep.subr.mxu0 0.0
    %237 = vmatpush1.msra.mxu0 0.0
    %238 = vmatprep.subr.mxu0 0.0
    %239 = vmatpush1.msra.mxu0 0.0
    %240 = vmatprep.subr.mxu0 0.0
    %241 = vmatpush1.msra.mxu0 0.0
    %242 = vmatprep.subr.mxu0 0.0
    %243 = vmatpush1.msra.mxu0 0.0
    %244 = vmatprep.subr.mxu0 0.0
    %245 = vmatpush1.msra.mxu0 0.0
    %246 = vmatprep.subr.mxu0 0.0
    %247 = vmatpush1.msra.mxu0 0.0
    %248 = vmatprep.subr.mxu0 0.0
    %249 = vmatpush1.msra.mxu0 0.0
    %250 = vmatprep.subr.mxu0 0.0
    %251 = vmatpush1.msra.mxu0 0.0
    %252 = vmatprep.subr.mxu0 0.0
    %253 = vmatpush1.msra.mxu0 0.0
    %254 = vmatprep.subr.mxu0 0.0
    %255 = vmatpush1.msra.mxu0 0.0
    %256 = vmatprep.subr.mxu0 0.0
    %257 = vmatpush1.msra.mxu0 0.0
    %258 = vmatprep.subr.mxu0 0.0
    %259 = vmatpush1.msra.mxu0 0.0
    %260 = vmatprep.subr.mxu0 0.0
    %261 = vmatpush1.msra.mxu0 0.0
    %262 = vmatprep.mubr.f32.mxu0 0.0
    %263 = vmatmul.mubr.f32.gmra.mrb[0].mxu0 %v174
    %v264 = vpop.f32.mrb[0].mxu0
    %v265 = vadd.f32 %v196, %v264
    %v266 = vpop.f32.mrb[0].mxu0
    %267 = vdwg.mxu0
    %v268 = vmax.f32 %v265, 0.0
    %v269 = vld [vmem:[#allocation8] sm:$0xff]
    %v270 = vld [vmem:[#allocation8 + $0x8] sm:$0xff]
    %v271 = vld [vmem:[#allocation8 + $0x10] sm:$0xff]
    %v272 = vld [vmem:[#allocation8 + $0x18] sm:$0xff]
    %v273 = vld [vmem:[#allocation8 + $0x20] sm:$0xff]
    %v274 = vld [vmem:[#allocation8 + $0x28] sm:$0xff]
    %v275 = vld [vmem:[#allocation8 + $0x30] sm:$0xff]
    %v276 = vld [vmem:[#allocation8 + $0x38] sm:$0xff]
    %v277 = vld [vmem:[#allocation8 + $0x40] sm:$0xff]
    %v278 = vld [vmem:[#allocation8 + $0x48] sm:$0xff]
    %v279 = vld [vmem:[#allocation8 + $0x50] sm:$0xff]
    %v280 = vld [vmem:[#allocation8 + $0x58] sm:$0xff]
    %v281 = vld [vmem:[#allocation8 + $0x60] sm:$0xff]
    %v282 = vld [vmem:[#allocation8 + $0x68] sm:$0xff]
    %v283 = vld [vmem:[#allocation8 + $0x70] sm:$0xff]
    %v284 = vld [vmem:[#allocation8 + $0x78] sm:$0xff]
    %v285 = vld [vmem:[%s6] sm:$0x1]
    %v287 = vlaneseq
    %v288 = vshrl.u32 %v287, 7
    %v289 = vsub.s32 0, %v288
    %v290 = vrot.slane %v285, %v289
    %292 = vmatprep.subr.mxu0 0.0
    %293 = vmatpush1.msra.mxu0 %v269
    %294 = vmatprep.subr.mxu0 0.0
    %295 = vmatpush1.msra.mxu0 %v270
    %296 = vmatprep.subr.mxu0 0.0
    %297 = vmatpush1.msra.mxu0 %v271
    %298 = vmatprep.subr.mxu0 0.0
    %299 = vmatpush1.msra.mxu0 %v272
    %300 = vmatprep.subr.mxu0 0.0
    %301 = vmatpush1.msra.mxu0 %v273
    %302 = vmatprep.subr.mxu0 0.0
    %303 = vmatpush1.msra.mxu0 %v274
    %304 = vmatprep.subr.mxu0 0.0
    %305 = vmatpush1.msra.mxu0 %v275
    %306 = vmatprep.subr.mxu0 0.0
    %307 = vmatpush1.msra.mxu0 %v276
    %308 = vmatprep.subr.mxu0 0.0
    %309 = vmatpush1.msra.mxu0 %v277
    %310 = vmatprep.subr.mxu0 0.0
    %311 = vmatpush1.msra.mxu0 %v278
    %312 = vmatprep.subr.mxu0 0.0
    %313 = vmatpush1.msra.mxu0 %v279
    %314 = vmatprep.subr.mxu0 0.0
    %315 = vmatpush1.msra.mxu0 %v280
    %316 = vmatprep.subr.mxu0 0.0
    %317 = vmatpush1.msra.mxu0 %v281
    %318 = vmatprep.subr.mxu0 0.0
    %319 = vmatpush1.msra.mxu0 %v282
    %320 = vmatprep.subr.mxu0 0.0
    %321 = vmatpush1.msra.mxu0 %v283
    %322 = vmatprep.subr.mxu0 0.0
    %323 = vmatpush1.msra.mxu0 %v284
    %324 = vmatprep.subr.mxu0 0.0
    %325 = vmatpush1.msra.mxu0 0.0
    %326 = vmatprep.subr.mxu0 0.0
    %327 = vmatpush1.msra.mxu0 0.0
    %328 = vmatprep.subr.mxu0 0.0
    %329 = vmatpush1.msra.mxu0 0.0
    %330 = vmatprep.subr.mxu0 0.0
    %331 = vmatpush1.msra.mxu0 0.0
    %332 = vmatprep.subr.mxu0 0.0
    %333 = vmatpush1.msra.mxu0 0.0
    %334 = vmatprep.subr.mxu0 0.0
    %335 = vmatpush1.msra.mxu0 0.0
    %336 = vmatprep.subr.mxu0 0.0
    %337 = vmatpush1.msra.mxu0 0.0
    %338 = vmatprep.subr.mxu0 0.0
    %339 = vmatpush1.msra.mxu0 0.0
    %340 = vmatprep.subr.mxu0 0.0
    %341 = vmatpush1.msra.mxu0 0.0
    %342 = vmatprep.subr.mxu0 0.0
    %343 = vmatpush1.msra.mxu0 0.0
    %344 = vmatprep.subr.mxu0 0.0
    %345 = vmatpush1.msra.mxu0 0.0
    %346 = vmatprep.subr.mxu0 0.0
    %347 = vmatpush1.msra.mxu0 0.0
    %348 = vmatprep.subr.mxu0 0.0
    %349 = vmatpush1.msra.mxu0 0.0
    %350 = vmatprep.subr.mxu0 0.0
    %351 = vmatpush1.msra.mxu0 0.0
    %352 = vmatprep.subr.mxu0 0.0
    %353 = vmatpush1.msra.mxu0 0.0
    %354 = vmatprep.subr.mxu0 0.0
    %355 = vmatpush1.msra.mxu0 0.0
    %356 = vmatprep.mubr.f32.mxu0 0.0
    %357 = vmatmul.mubr.f32.gmra.mrb[0].mxu0 %v268
    %v358 = vpop.f32.mrb[0].mxu0
    %v359 = vadd.f32 %v290, %v358
    %v360 = vpop.f32.mrb[0].mxu0
    %361 = vdwg.mxu0
    %362 = vst [vmem:[#allocation10] sm:$0xff] %v359
    // Predicated region
    $region46: #{tpu_custom_call.1} parent=1 // pred_check
      _
    $region47: #{tpu_custom_call.1} parent=1 // pred_check_branch
      %364 = sbr.rel (0) target = $region49
    $region48: #{tpu_custom_call.1} parent=1 // pred_region
      %s366 = ssub.s32 128, 128
      %367 = vsyncadd [#allocation4], %s366
      %s369 = sshll.u32 [#allocation10], 4
      %s370 = int_to_ptr.vmem [resolvable:$true] %s369
      %372 = dma.vmem_to_hbm [thread:$0]  %s370, 128, %s7, [#allocation4]
    $region49: #{tpu_custom_call.1} parent=1 // pred_fallthru
      _
    // Predicated region
    $region50: #{tpu_custom_call.1} parent=1 // pred_check
      _
    $region51: #{tpu_custom_call.1} parent=1 // pred_check_branch
      %374 = sbr.rel (0) target = $region53
    $region52: #{tpu_custom_call.1} parent=1 // pred_region
      %375 = dma.done [#allocation4], 128
    $region53: #{tpu_custom_call.1} parent=1 // pred_fallthru
      _
    %376 = vsyncpa [#allocation3], 1
    %377 = vsyncpa [#allocation6], 1
    %378 = vsyncpa [#allocation9], 1
    %379 = vsyncpa [#allocation4], 1

</llo_original>
